<compile_context>
chip_gen: v6e
topology: v6e:2x2x1
jax: 0.10.0
libtpu: 0.0.40
codegen_flags: <defaults>
</compile_context>

<pallas_src>
import functools

import jax
import jax.numpy as jnp
from jax.experimental import pallas as pl
from jax.experimental.pallas import tpu as pltpu


def _round_up(x, m):
    return ((x + m - 1) // m) * m


def _tile_bytes_target():
    """Per-generation tile-byte target; keeps 2x(in+out) under scoped VMEM."""
    try:
        kind = jax.devices()[0].device_kind.lower()
    except Exception:
        kind = ""
    if "v5" in kind:          # 16 MiB scoped-VMEM default -> ~2 MiB tiles
        return 2 * 1024 * 1024
    if "v7" in kind:          # 3.2 TB/s HBM, 32 MiB scoped default -> ~6 MiB
        return 6 * 1024 * 1024
    return 4 * 1024 * 1024    # v6e and default


def _choose_tiles(rows, cols, sub, target_elems):
    """Pick (tr, tw): tr is a multiple of `sub` or == rows; tw a multiple of
    128 or == cols (both always legal block shapes, edges are masked)."""
    cols_cap = _round_up(cols, 128)
    # Lane tile: prefer a 128-multiple that divides the 128-aligned extent
    # (keeps edge blocks rare), capped at 2048 lanes to leave room for rows.
    if cols_cap <= 2048:
        tw = cols_cap
    else:
        tw = next((t for t in range(2048, 511, -128) if cols_cap % t == 0), 2048)
    # Row tile: fill the byte budget at this lane width.
    tr = max(sub, (target_elems // tw) // sub * sub)
    if tr >= rows:
        tr = rows                         # full-dim block (always legal)
    # Skinny shapes: rows clamped tr -> widen the lane tile to keep tile bytes
    # near the target instead of collapsing to a tiny tile.
    if tr * tw < target_elems and tw < cols_cap:
        tw = min(cols_cap, (target_elems // max(tr, 1)) // 128 * 128)
    if tw >= cols:
        tw = cols                         # full-dim block (always legal)
    return tr, tw


def _activ_kernel(x_ref, b_ref, o_ref, *, leak):
    # x_ref / o_ref: (tr, tw) tile; b_ref broadcasts ((tr, 1) or (1, tw)).
    y = x_ref[...] + b_ref[...]
    if leak == 0.0:
        o_ref[...] = jnp.maximum(y, 0.0)
    elif 0.0 < leak < 1.0:
        # leaky_relu(y) == max(y, leak*y) for 0 <= leak < 1 (drops cmp+select)
        o_ref[...] = jnp.maximum(y, leak * y)
    else:
        o_ref[...] = jnp.where(y > 0, y, leak * y)


def activ_forward(x, bias, *, leak=0.0, donate_input=False):
    """Bias + (Leaky)ReLU.  x: (N, C, H, W);  bias: (C,)."""
    N, C, H, W = x.shape
    HW = H * W
    itemsize = jnp.dtype(x.dtype).itemsize
    sub = 8 if itemsize >= 4 else (16 if itemsize == 2 else 32)
    target_elems = _tile_bytes_target() // itemsize

    if HW % 128 == 0 or HW >= 256:
        # Layout A: (N*C, HW); one bias scalar per row.
        rows, cols = N * C, HW
        x2 = x.reshape(rows, cols)
        b2 = jnp.tile(bias.astype(x.dtype), N).reshape(rows, 1)
        tr, tw = _choose_tiles(rows, cols, sub, target_elems)
        bias_spec = pl.BlockSpec((tr, 1), lambda i, j: (i, 0))
    else:
        # Layout B (tiny spatial maps): (N, C*H*W); bias expanded along lanes
        # once in the wrapper (C*HW elements -- tiny vs. the activations).
        rows, cols = N, C * HW
        x2 = x.reshape(rows, cols)
        b2 = jnp.repeat(bias.astype(x.dtype), HW).reshape(1, cols)
        tr, tw = _choose_tiles(rows, cols, sub, target_elems)
        bias_spec = pl.BlockSpec((1, tw), lambda i, j: (0, j))

    grid = (pl.cdiv(rows, tr), pl.cdiv(cols, tw))
    out = pl.pallas_call(
        functools.partial(_activ_kernel, leak=float(leak)),
        out_shape=jax.ShapeDtypeStruct((rows, cols), x.dtype),
        grid_spec=pltpu.PrefetchScalarGridSpec(
            num_scalar_prefetch=0,
            grid=grid,
            in_specs=[
                pl.BlockSpec((tr, tw), lambda i, j: (i, j)),
                bias_spec,
            ],
            out_specs=pl.BlockSpec((tr, tw), lambda i, j: (i, j)),
        ),
        compiler_params=pltpu.CompilerParams(
            dimension_semantics=("parallel", "parallel"),
        ),
        input_output_aliases={0: 0} if donate_input else {},
    )(x2, b2)
    return out.reshape(N, C, H, W)


def _reference(x, bias, leak):
    C = bias.shape[0]
    y = x + bias.reshape(1, C, 1, 1)
    if leak == 0.0:
        return jnp.maximum(y, 0.0)
    return jnp.where(y > 0, y, leak * y)


if __name__ == "__main__":
    key = jax.random.PRNGKey(0)
    kx, kb, kx2, kb2 = jax.random.split(key, 4)

    # Layout A path (HW = 256, multiple of 128).
    N, C, H, W = 2, 4, 16, 16
    x = jax.random.normal(kx, (N, C, H, W), dtype=jnp.float32)
    # PyTorch Parameter(torch.zeros(features)) -> zeros; use small nonzero
    # deterministic values so the bias path is actually exercised.
    bias = 0.1 * jax.random.normal(kb, (C,), dtype=jnp.float32)

    # Activ(features, norm=None, leak=0) -> Bias + ReLU
    y0 = activ_forward(x, bias, leak=0.0)
    jax.block_until_ready(y0)
    assert jnp.allclose(y0, _reference(x, bias, 0.0), atol=1e-6), "relu mismatch"

    # Activ(features, norm=None, leak=0.1) -> Bias + LeakyReLU(0.1)
    y1 = activ_forward(x, bias, leak=0.1)
    jax.block_until_ready(y1)
    assert jnp.allclose(y1, _reference(x, bias, 0.1), atol=1e-6), "leaky mismatch"

    # Layout B path (tiny 7x7 spatial map, HW = 49 < 256).
    xs = jax.random.normal(kx2, (2, 3, 7, 7), dtype=jnp.float32)
    bs = 0.1 * jax.random.normal(kb2, (3,), dtype=jnp.float32)
    y2 = activ_forward(xs, bs, leak=0.2)
    jax.block_until_ready(y2)
    assert jnp.allclose(y2, _reference(xs, bs, 0.2), atol=1e-6), "tiny-HW mismatch"

    print("KERNEL_OK")
</pallas_src>

<mosaic_0001>
module attributes {stable_mosaic.version = 11 : i64} {
  func.func @_activ_kernel(%arg0: i32, %arg1: i32, %arg2: memref<8x256xf32, #tpu.memory_space<vmem>>, %arg3: memref<8x1xf32, #tpu.memory_space<vmem>>, %arg4: memref<8x256xf32, #tpu.memory_space<vmem>>) attributes {dimension_semantics = [#tpu.dimension_semantics<parallel>, #tpu.dimension_semantics<parallel>], iteration_bounds = array<i64: 1, 1>, scalar_prefetch = 0 : i64, scratch_operands = 0 : i64, tpu.core_type = #tpu.core_type<tc>, window_params = [{transform_indices = @transform_0, window_bounds = array<i64: 8, 256>}, {transform_indices = @transform_1, window_bounds = array<i64: 8, 1>}, {transform_indices = @transform_2, window_bounds = array<i64: 8, 256>}]} {
    %c0 = arith.constant 0 : index
    %c0_0 = arith.constant 0 : index
    %0 = vector.load %arg2[%c0, %c0_0] : memref<8x256xf32, #tpu.memory_space<vmem>>, vector<8x256xf32>
    %c0_1 = arith.constant 0 : index
    %c0_2 = arith.constant 0 : index
    %1 = vector.load %arg3[%c0_1, %c0_2] : memref<8x1xf32, #tpu.memory_space<vmem>>, vector<8x1xf32>
    %2 = vector.broadcast %1 : vector<8x1xf32> to vector<8x256xf32>
    %3 = arith.addf %0, %2 : vector<8x256xf32>
    %cst = arith.constant 0.000000e+00 : f32
    %4 = vector.broadcast %cst : f32 to vector<8x256xf32>
    %5 = arith.maximumf %3, %4 : vector<8x256xf32>
    %c0_3 = arith.constant 0 : index
    %c0_4 = arith.constant 0 : index
    %6 = vector.load %arg4[%c0_3, %c0_4] : memref<8x256xf32, #tpu.memory_space<vmem>>, vector<8x256xf32>
    tpu.vector_store %arg4[%c0_3, %c0_4], %5 {strides = array<i32>} : memref<8x256xf32, #tpu.memory_space<vmem>>, vector<8x256xf32>,
    return
  }
  func.func @transform_0(%arg0: i32, %arg1: i32) -> (i32, i32) {
    %c0_i32 = arith.constant 0 : i32
    return %arg0, %arg1 : i32, i32
  }
  func.func @transform_1(%arg0: i32, %arg1: i32) -> (i32, i32) {
    %c0_i32 = arith.constant 0 : i32
    %c0_i32_0 = arith.constant 0 : i32
    return %arg0, %c0_i32 : i32, i32
  }
  func.func @transform_2(%arg0: i32, %arg1: i32) -> (i32, i32) {
    %c0_i32 = arith.constant 0 : i32
    return %arg0, %arg1 : i32, i32
  }
}

</mosaic_0001>

<llo_original>
// kernel: tpu_custom_call.1
$region0: #{tpu_custom_call.1}
  #allocation0 [shape = 'u32[]', space=smem, size = 0x4, offset = 0x4, fixed_abs, tag = 'smem constant byte address 0x4 - core index']
  #allocation1 [shape = 'u32[144,128]{1,0:T(1,128)}', space=vmem, size = 0x12000, scoped, tag = 'internal scratch']
  %s0 = inlined_call_operand.hbm [shape: f32[8,256], index: 0, kind: input, shape index: {}]
  %s1 = inlined_call_operand.vmem [shape: f32[8,1], index: 1, kind: input, shape index: {}]
  %s2 = inlined_call_operand.hbm [shape: f32[8,256], index: 2, kind: output, shape index: {}]
  %s3 = sld [smem:[#allocation0]]
  $region22: #{tpu_custom_call.1} parent=0
    _
  %s5 = ssub.s32 1, %s3
  %s6 = scalar_select 0, %s5, %s3
  $region1: #{tpu_custom_call.1} parent=0
    #allocation2 [shape = 'u8[8192]{0}', space=vmem, size = 0x2000, scoped, tag = 'input window, operand 0, single buffered']
    #allocation3 [shape = 's32[1]{0}', space=sflag, size = 0x4, scoped, tag = 'scoped memory for tpu_custom_call.1']
    #allocation4 [shape = 's32[1]{0}', space=sflag, size = 0x4, scoped, tag = 'scoped memory for tpu_custom_call.1']
    #allocation5 [shape = 'u8[8192]{0}', space=vmem, size = 0x2000, scoped, tag = 'output window, operand 0, single buffered']
    %7 = vsyncpa [#allocation3], 0
    %8 = vsyncpa [#allocation4], 0
    // Predicated region
    $region2: #{tpu_custom_call.1} parent=1 // pred_check
      _
    $region3: #{tpu_custom_call.1} parent=1 // pred_check_branch
      %10 = sbr.rel (0) target = $region5
    $region4: #{tpu_custom_call.1} parent=1 // pred_region
      %s12 = ssub.s32 256, 256
      %13 = vsyncadd [#allocation3], %s12
      %s15 = sshll.u32 [#allocation2], 4
      %s16 = int_to_ptr.vmem [resolvable:$true] %s15
      %18 = dma.hbm_to_vmem [thread:$0]  %s0, 256, %s16, [#allocation3]
    $region5: #{tpu_custom_call.1} parent=1 // pred_fallthru
      _
    // Predicated region
    $region6: #{tpu_custom_call.1} parent=1 // pred_check
      _
    $region7: #{tpu_custom_call.1} parent=1 // pred_check_branch
      %20 = sbr.rel (0) target = $region9
    $region8: #{tpu_custom_call.1} parent=1 // pred_region
      _
    $region9: #{tpu_custom_call.1} parent=1 // pred_fallthru
      _
    // Predicated region
    $region10: #{tpu_custom_call.1} parent=1 // pred_check
      _
    $region11: #{tpu_custom_call.1} parent=1 // pred_check_branch
      %22 = sbr.rel (0) target = $region13
    $region12: #{tpu_custom_call.1} parent=1 // pred_region
      %23 = dma.done [#allocation3], 256
    $region13: #{tpu_custom_call.1} parent=1 // pred_fallthru
      _
    %v24 = vld [vmem:[#allocation2] sm:$0xff]
    %v25 = vld [vmem:[#allocation2 + $0x8] sm:$0xff]
    %v26 = vld [vmem:[%s1] sm:$0xff]
    %28 = vset.pattern.permute.xlu0 0
    %29 = vperm.xlu0 %28, %v26
    %v30 = vpop.permute.xlu0 %29
    %v32 = vadd.f32 %v24, %v30
    %v33 = vadd.f32 %v25, %v30
    %v34 = vmax.f32 %v32, 0.0
    %v35 = vmax.f32 %v33, 0.0
    %36 = vst [vmem:[#allocation5] sm:$0xff] %v34
    %37 = vst [vmem:[#allocation5 + $0x8] sm:$0xff] %v35
    // Predicated region
    $region14: #{tpu_custom_call.1} parent=1 // pred_check
      _
    $region15: #{tpu_custom_call.1} parent=1 // pred_check_branch
      %39 = sbr.rel (0) target = $region17
    $region16: #{tpu_custom_call.1} parent=1 // pred_region
      %s41 = ssub.s32 256, 256
      %42 = vsyncadd [#allocation4], %s41
      %s44 = sshll.u32 [#allocation5], 4
      %s45 = int_to_ptr.vmem [resolvable:$true] %s44
      %47 = dma.vmem_to_hbm [thread:$0]  %s45, 256, %s2, [#allocation4]
    $region17: #{tpu_custom_call.1} parent=1 // pred_fallthru
      _
    // Predicated region
    $region18: #{tpu_custom_call.1} parent=1 // pred_check
      _
    $region19: #{tpu_custom_call.1} parent=1 // pred_check_branch
      %49 = sbr.rel (0) target = $region21
    $region20: #{tpu_custom_call.1} parent=1 // pred_region
      %50 = dma.done [#allocation4], 256
    $region21: #{tpu_custom_call.1} parent=1 // pred_fallthru
      _
    %51 = vsyncpa [#allocation3], 1
    %52 = vsyncpa [#allocation4], 1

</llo_original>
